<compile_context>
chip_gen: v5e
topology: v5e:2x2
jax: 0.10.0
libtpu: 0.0.40
codegen_flags: <defaults>
</compile_context>

<pallas_src>
import functools

import jax
import jax.numpy as jnp
from jax.experimental import pallas as pl
from jax.experimental.pallas import tpu as pltpu


def _round_up(x, m):
    return ((x + m - 1) // m) * m


def _attention_gate_kernel(wm_ref, up_ref, lp_ref, x_ref, o_ref, *, pp_valid):
    """One (batch-tile, channel-tile) grid step.

    wm_ref: (classes, PPp)  per-class channel-mean FC weight, f32 (resident block)
    up_ref: (PPp, Sp)       static nearest-upsample 0/1 matrix, f32 (resident block)
    lp_ref: (NB, Cin, PPp)  adaptively pooled raw input (native dtype)
    x_ref : (NB, CB, Sp)    concatenated stream features (native dtype)
    o_ref : (NB, CB, Sp)    gated output
    """
    # --- SpatialAttentionBlock_F: per-class CAM, spatial min-max norm, class mean ---
    lp = lp_ref[...].astype(jnp.float32)
    l_mean = jnp.mean(lp, axis=1, keepdims=True)              # (NB, 1, PPp)
    wm = wm_ref[...].astype(jnp.float32)[None, :, :]          # (1, classes, PPp)
    cam = wm * l_mean                                         # (NB, classes, PPp)

    lane = jax.lax.broadcasted_iota(jnp.int32, cam.shape, 2)
    valid = lane < pp_valid                                   # mask padded P*P lanes
    cmin = jnp.min(jnp.where(valid, cam, jnp.inf), axis=-1, keepdims=True)
    cam = cam - cmin
    cmax = jnp.max(jnp.where(valid, cam, -jnp.inf), axis=-1, keepdims=True)
    cam = cam / cmax                                          # matches torch: /(max after -min)
    y = jnp.mean(cam, axis=1)                                 # (NB, PPp)

    # --- nearest-neighbour upsample as a tiny MXU matmul (no gather) ----------------
    a_up = jnp.dot(y, up_ref[...], preferred_element_type=jnp.float32)   # (NB, Sp)

    # --- gate: broadcast attention map over channels, multiply in native dtype ------
    x = x_ref[...]
    o_ref[...] = (a_up[:, None, :].astype(x.dtype) * x).astype(o_ref.dtype)


def _pick_channel_tile(c, sp, itemsize, budget_bytes):
    """Largest divisor of c whose (1, CB, Sp) slab fits the budget, keeping the sublane
    dim (8,128)-friendly (CB multiple of 8 or CB == c)."""
    if c * sp * itemsize <= budget_bytes:
        return c
    cands = [d for d in range(1, c + 1) if c % d == 0 and (d % 8 == 0 or d == c)]
    fitting = [d for d in cands if d * sp * itemsize <= budget_bytes]
    return max(fitting) if fitting else min(cands)


def _pick_batch_tile(n, per_batch_bytes, budget_bytes):
    """Largest batch tile within budget; keep >= 2 grid steps when n >= 2 so the batch
    axis can still be sharded across both v7x TensorCores."""
    nb = max(1, min(n, budget_bytes // max(1, per_batch_bytes)))
    if n >= 2:
        nb = min(nb, max(1, n // 2))
    while n % nb:
        nb -= 1
    return nb


def rcn_c_attention_gate(x_feat, l_pool, fc_weight, *, num_classes, featuremaps,
                         pool_size, budget_bytes=2 << 20):
    """Fused RCN_C attention gating.

    x_feat:    (N, Cf, H, W)   concatenated stream1/2/3 output (the tensor being gated)
    l_pool:    (N, Cin, P, P)  adaptive-avg-pooled raw input
    fc_weight: (num_classes, P*P*featuremaps)  FC ("classifier") weight
    Returns (N, Cf, H, W) = interpolate(SpatialAttentionBlock_F(l_pool, w), (H, W)) * x_feat
    """
    N, Cf, H, W = x_feat.shape
    Np, Cin, P1, P2 = l_pool.shape
    P = pool_size
    assert (Np, P1, P2) == (N, P, P)
    assert fc_weight.shape == (num_classes, P * P * featuremaps)

    PP = P * P
    S = H * W
    Sp = _round_up(S, 128)
    PPp = _round_up(PP, 128)

    # Per-class channel-mean of the FC weight: w[idx].reshape(featuremaps, P, P).mean(0)
    w_mean = fc_weight.astype(jnp.float32).reshape(num_classes, featuremaps, PP).mean(axis=1)
    w_mean = jnp.pad(w_mean, ((0, 0), (0, PPp - PP)))

    # Static nearest-upsample matrix: column s (= h*W + w) of the flattened (H, W) grid
    # selects source cell floor(h*P/H)*P + floor(w*P/W). Padded rows/cols are zero, so
    # padded lanes contribute nothing and padded outputs are exactly zero.
    hh = (jnp.arange(H) * P) // H
    ww = (jnp.arange(W) * P) // W
    src = (hh[:, None] * P + ww[None, :]).reshape(S)
    up = (jnp.arange(PPp)[:, None] == src[None, :]).astype(jnp.float32)
    up = jnp.pad(up, ((0, 0), (0, Sp - S)))

    lp = l_pool.reshape(N, Cin, PP)
    if PPp != PP:
        lp = jnp.pad(lp, ((0, 0), (0, 0), (0, PPp - PP)))

    x = x_feat.reshape(N, Cf, S)
    if Sp != S:
        x = jnp.pad(x, ((0, 0), (0, 0), (0, Sp - S)))

    itemsize = jnp.dtype(x_feat.dtype).itemsize
    CB = _pick_channel_tile(Cf, Sp, itemsize, budget_bytes)
    NB = _pick_batch_tile(N, CB * Sp * itemsize, budget_bytes)

    kernel = functools.partial(_attention_gate_kernel, pp_valid=PP)

    # VMEM budget: in/out stream tiles are double-buffered; resident blocks are small.
    tile_bytes = NB * CB * Sp * itemsize
    resident = PPp * Sp * 4 + num_classes * PPp * 4 + 2 * NB * Cin * PPp * 4
    cp_kwargs = {}
    needed = 4 * tile_bytes + resident + (1 << 20)
    if needed > (16 << 20):
        cp_kwargs["vmem_limit_bytes"] = min(needed, 48 << 20)

    out = pl.pallas_call(
        kernel,
        out_shape=jax.ShapeDtypeStruct((N, Cf, Sp), x_feat.dtype),
        grid_spec=pltpu.PrefetchScalarGridSpec(
            num_scalar_prefetch=0,
            grid=(N // NB, Cf // CB),
            in_specs=[
                pl.BlockSpec((num_classes, PPp), lambda n, c: (0, 0)),   # resident
                pl.BlockSpec((PPp, Sp), lambda n, c: (0, 0)),            # resident
                pl.BlockSpec((NB, Cin, PPp), lambda n, c: (n, 0, 0)),
                pl.BlockSpec((NB, CB, Sp), lambda n, c: (n, c, 0)),
            ],
            out_specs=pl.BlockSpec((NB, CB, Sp), lambda n, c: (n, c, 0)),
        ),
        compiler_params=pltpu.CompilerParams(
            dimension_semantics=("parallel", "parallel"),
            **cp_kwargs,
        ),
    )(w_mean, up, lp, x)

    return out[..., :S].reshape(N, Cf, H, W)


def _adaptive_avg_pool_divisible(x, out_size):
    """AdaptiveAvgPool2d for the divisible case (demo).  TODO(synk): general adaptive
    pooling (uneven buckets) is left to XLA."""
    N, C, H, W = x.shape
    assert H % out_size == 0 and W % out_size == 0
    kh, kw = H // out_size, W // out_size
    return x.reshape(N, C, out_size, kh, out_size, kw).mean(axis=(3, 5))


def _reference(x_feat, l_pool, fc_weight, num_classes, featuremaps, pool_size):
    """Pure-JAX reference matching the PyTorch attention-gating path exactly."""
    P = pool_size
    N, Cf, H, W = x_feat.shape
    xf = x_feat.astype(jnp.float32)
    lp = l_pool.astype(jnp.float32)
    w_mean = fc_weight.astype(jnp.float32).reshape(num_classes, featuremaps, P, P).mean(axis=1)
    l_mean = lp.mean(axis=1, keepdims=True)                      # (N, 1, P, P)
    cam = w_mean[None, :, :, :] * l_mean                         # (N, classes, P, P)
    cmin = cam.min(axis=(2, 3), keepdims=True)
    cam = cam - cmin
    cmax = cam.max(axis=(2, 3), keepdims=True)
    cam = cam / cmax
    y = cam.mean(axis=1, keepdims=True)                          # (N, 1, P, P)
    hi = (jnp.arange(H) * P) // H                                # F.interpolate default: nearest
    wi = (jnp.arange(W) * P) // W
    y_up = y[:, :, hi, :][:, :, :, wi]                           # (N, 1, H, W)
    return (y_up * xf).astype(x_feat.dtype)


if __name__ == "__main__":
    key = jax.random.PRNGKey(0)
    num_input, featuremaps, num_classes, pool_size = 3, 16, 3, 5

    def run_check(raw_hw, feat_hw):
        kx, kf, kw = jax.random.split(jax.random.fold_in(key, raw_hw * 100 + feat_hw), 3)
        x_raw = jax.random.normal(kx, (2, num_input, raw_hw, raw_hw), dtype=jnp.float32)
        # TODO(synk): stream1/2/3 (strided & dilated convs + BN + ReLU + Dropout) stay in
        # XLA; a random concatenated feature map of the matching shape stands in here.
        x_feat = jax.random.normal(kf, (2, featuremaps, feat_hw, feat_hw), dtype=jnp.float32)
        fc_w = 0.01 * jax.random.normal(
            kw, (num_classes, pool_size * pool_size * featuremaps), dtype=jnp.float32)
        l_pool = _adaptive_avg_pool_divisible(x_raw, pool_size)

        out = jax.block_until_ready(
            rcn_c_attention_gate(x_feat, l_pool, fc_w, num_classes=num_classes,
                                 featuremaps=featuremaps, pool_size=pool_size))
        ref = _reference(x_feat, l_pool, fc_w, num_classes, featuremaps, pool_size)
        assert out.shape == x_feat.shape
        assert jnp.allclose(out, ref, atol=1e-3, rtol=1e-3), (
            f"mismatch vs reference for raw={raw_hw}, feat={feat_hw}")

    run_check(30, 10)   # stride-3 streams: 30x30 raw -> 10x10 features (S=100 -> Sp=128)
    run_check(30, 16)   # lane-aligned spatial case (S=256)

    print("KERNEL_OK")
</pallas_src>

<mosaic_0001>
module attributes {stable_mosaic.version = 11 : i64} {
  func.func @_attention_gate_kernel(%arg0: i32, %arg1: i32, %arg2: memref<3x128xf32, #tpu.memory_space<vmem>>, %arg3: memref<128x128xf32, #tpu.memory_space<vmem>>, %arg4: memref<1x3x128xf32, #tpu.memory_space<vmem>>, %arg5: memref<1x16x128xf32, #tpu.memory_space<vmem>>, %arg6: memref<1x16x128xf32, #tpu.memory_space<vmem>>) attributes {dimension_semantics = [#tpu.dimension_semantics<parallel>, #tpu.dimension_semantics<parallel>], iteration_bounds = array<i64: 2, 1>, scalar_prefetch = 0 : i64, scratch_operands = 0 : i64, tpu.core_type = #tpu.core_type<tc>, window_params = [{pipeline_mode = #tpu.pipeline_mode<synchronous>, transform_indices = @transform_0, window_bounds = array<i64: 3, 128>}, {pipeline_mode = #tpu.pipeline_mode<synchronous>, transform_indices = @transform_1, window_bounds = array<i64: 128, 128>}, {transform_indices = @transform_2, window_bounds = array<i64: 1, 3, 128>}, {transform_indices = @transform_3, window_bounds = array<i64: 1, 16, 128>}, {transform_indices = @transform_4, window_bounds = array<i64: 1, 16, 128>}]} {
    %c0 = arith.constant 0 : index
    %c0_0 = arith.constant 0 : index
    %c0_1 = arith.constant 0 : index
    %0 = vector.load %arg4[%c0, %c0_0, %c0_1] : memref<1x3x128xf32, #tpu.memory_space<vmem>>, vector<1x3x128xf32>
    %cst = arith.constant dense<0.000000e+00> : vector<1x128xf32>
    %1 = vector.multi_reduction <add>, %0, %cst [1] : vector<1x3x128xf32> to vector<1x128xf32>
    %2 = vector.shape_cast %1 : vector<1x128xf32> to vector<1x1x128xf32>
    %cst_2 = arith.constant 3.000000e+00 : f32
    %3 = vector.broadcast %cst_2 : f32 to vector<1x1x128xf32>
    %4 = arith.divf %2, %3 : vector<1x1x128xf32>
    %c0_3 = arith.constant 0 : index
    %c0_4 = arith.constant 0 : index
    %5 = vector.load %arg2[%c0_3, %c0_4] : memref<3x128xf32, #tpu.memory_space<vmem>>, vector<3x128xf32>
    %6 = vector.shape_cast %5 : vector<3x128xf32> to vector<1x3x128xf32>
    %7 = vector.broadcast %4 : vector<1x1x128xf32> to vector<1x3x128xf32>
    %8 = arith.mulf %6, %7 : vector<1x3x128xf32>
    %9 = tpu.iota {dimensions = array<i32: 2>} : vector<1x3x128xi32>
    %c25_i32 = arith.constant 25 : i32
    %10 = vector.broadcast %c25_i32 : i32 to vector<1x3x128xi32>
    %11 = arith.cmpi slt, %9, %10 : vector<1x3x128xi32>
    %cst_5 = arith.constant 0x7F800000 : f32
    %12 = vector.broadcast %cst_5 : f32 to vector<1x3x128xf32>
    %13 = arith.select %11, %8, %12 : vector<1x3x128xi1>, vector<1x3x128xf32>
    %cst_6 = arith.constant dense<0x7F800000> : vector<1x3xf32>
    %14 = vector.multi_reduction <minimumf>, %13, %cst_6 [2] : vector<1x3x128xf32> to vector<1x3xf32>
    %15 = vector.shape_cast %14 : vector<1x3xf32> to vector<1x3x1xf32>
    %16 = vector.broadcast %15 : vector<1x3x1xf32> to vector<1x3x128xf32>
    %17 = arith.subf %8, %16 : vector<1x3x128xf32>
    %cst_7 = arith.constant 0xFF800000 : f32
    %18 = vector.broadcast %cst_7 : f32 to vector<1x3x128xf32>
    %19 = arith.select %11, %17, %18 : vector<1x3x128xi1>, vector<1x3x128xf32>
    %cst_8 = arith.constant dense<0xFF800000> : vector<1x3xf32>
    %20 = vector.multi_reduction <maximumf>, %19, %cst_8 [2] : vector<1x3x128xf32> to vector<1x3xf32>
    %21 = vector.shape_cast %20 : vector<1x3xf32> to vector<1x3x1xf32>
    %22 = vector.broadcast %21 : vector<1x3x1xf32> to vector<1x3x128xf32>
    %23 = arith.divf %17, %22 : vector<1x3x128xf32>
    %cst_9 = arith.constant dense<0.000000e+00> : vector<1x128xf32>
    %24 = vector.multi_reduction <add>, %23, %cst_9 [1] : vector<1x3x128xf32> to vector<1x128xf32>
    %cst_10 = arith.constant 3.000000e+00 : f32
    %25 = vector.broadcast %cst_10 : f32 to vector<1x128xf32>
    %26 = arith.divf %24, %25 : vector<1x128xf32>
    %c0_11 = arith.constant 0 : index
    %c0_12 = arith.constant 0 : index
    %27 = vector.load %arg3[%c0_11, %c0_12] : memref<128x128xf32, #tpu.memory_space<vmem>>, vector<128x128xf32>
    %cst_13 = arith.constant dense<0.000000e+00> : vector<1x128xf32>
    %28 = tpu.matmul %26, %27, %cst_13 {dimension_numbers = #tpu.dot_dimension_numbers<[1], [0], [0], [1], [0, 0, 1, 1], [], []>} : vector<1x128xf32>, vector<128x128xf32>, vector<1x128xf32> -> vector<1x128xf32>
    %c0_14 = arith.constant 0 : index
    %c0_15 = arith.constant 0 : index
    %c0_16 = arith.constant 0 : index
    %29 = vector.load %arg5[%c0_14, %c0_15, %c0_16] : memref<1x16x128xf32, #tpu.memory_space<vmem>>, vector<1x16x128xf32>
    %30 = vector.shape_cast %28 : vector<1x128xf32> to vector<1x1x128xf32>
    %31 = vector.broadcast %30 : vector<1x1x128xf32> to vector<1x16x128xf32>
    %32 = arith.mulf %31, %29 : vector<1x16x128xf32>
    %c0_17 = arith.constant 0 : index
    %c0_18 = arith.constant 0 : index
    %c0_19 = arith.constant 0 : index
    %33 = vector.load %arg6[%c0_17, %c0_18, %c0_19] : memref<1x16x128xf32, #tpu.memory_space<vmem>>, vector<1x16x128xf32>
    tpu.vector_store %arg6[%c0_17, %c0_18, %c0_19], %32 {strides = array<i32>} : memref<1x16x128xf32, #tpu.memory_space<vmem>>, vector<1x16x128xf32>,
    return
  }
  func.func @transform_0(%arg0: i32, %arg1: i32) -> (i32, i32) {
    %c0_i32 = arith.constant 0 : i32
    %c0_i32_0 = arith.constant 0 : i32
    %c0_i32_1 = arith.constant 0 : i32
    return %c0_i32, %c0_i32_0 : i32, i32
  }
  func.func @transform_1(%arg0: i32, %arg1: i32) -> (i32, i32) {
    %c0_i32 = arith.constant 0 : i32
    %c0_i32_0 = arith.constant 0 : i32
    %c0_i32_1 = arith.constant 0 : i32
    return %c0_i32, %c0_i32_0 : i32, i32
  }
  func.func @transform_2(%arg0: i32, %arg1: i32) -> (i32, i32, i32) {
    %c0_i32 = arith.constant 0 : i32
    %c0_i32_0 = arith.constant 0 : i32
    %c0_i32_1 = arith.constant 0 : i32
    return %arg0, %c0_i32, %c0_i32_0 : i32, i32, i32
  }
  func.func @transform_3(%arg0: i32, %arg1: i32) -> (i32, i32, i32) {
    %c0_i32 = arith.constant 0 : i32
    %c0_i32_0 = arith.constant 0 : i32
    return %arg0, %arg1, %c0_i32 : i32, i32, i32
  }
  func.func @transform_4(%arg0: i32, %arg1: i32) -> (i32, i32, i32) {
    %c0_i32 = arith.constant 0 : i32
    %c0_i32_0 = arith.constant 0 : i32
    return %arg0, %arg1, %c0_i32 : i32, i32, i32
  }
}

</mosaic_0001>

<llo_original>
// kernel: tpu_custom_call.1
$region0: #{tpu_custom_call.1}
  #allocation0 [shape = 'u32[]', space=smem, size = 0x4, offset = 0x4, fixed_abs, tag = 'smem constant byte address 0x4 - core index']
  #allocation1 [shape = 'u32[72,128]{1,0:T(1,128)}', space=vmem, size = 0x9000, scoped, tag = 'internal scratch']
  %s0 = inlined_call_operand.vmem [shape: f32[3,128], index: 0, kind: input, shape index: {}]
  %s1 = inlined_call_operand.hbm [shape: f32[128,128], index: 1, kind: input, shape index: {}]
  %s2 = inlined_call_operand.vmem [shape: f32[2,3,128], index: 2, kind: input, shape index: {}]
  %s3 = inlined_call_operand.hbm [shape: f32[2,16,128], index: 3, kind: input, shape index: {}]
  %s4 = inlined_call_operand.hbm [shape: f32[2,16,128], index: 4, kind: output, shape index: {}]
  %s5 = sld [smem:[#allocation0]]
  $region57: #{tpu_custom_call.1} parent=0
    _
  %s7 = ssub.s32 1, %s5
  %s8 = scalar_select 0, %s7, %s5
  $region1: #{tpu_custom_call.1} parent=0
    #allocation2 [shape = 'u8[65536]{0}', space=vmem, size = 0x10000, scoped, tag = 'input window, operand 1, single buffered']
    #allocation3 [shape = 's32[2]{0}', space=sflag, size = 0x8, scoped, tag = 'scoped memory for tpu_custom_call.1']
    #allocation4 [shape = 's32[2]{0}', space=sflag, size = 0x8, scoped, tag = 'scoped memory for tpu_custom_call.1']
    #allocation5 [shape = 'u8[16384]{0}', space=vmem, size = 0x4000, scoped, tag = 'input window, operand 3']
    #allocation6 [shape = 's32[2]{0}', space=sflag, size = 0x8, scoped, tag = 'scoped memory for tpu_custom_call.1']
    #allocation7 [shape = 'u8[16384]{0}', space=vmem, size = 0x4000, scoped, tag = 'output window, operand 0']
    %9 = vsyncpa [#allocation3], 0
    %10 = vsyncpa [#allocation6], 0
    %s11 = scalar_lea.sflag [#allocation6], 1
    %12 = vsyncpa %s11, 0
    %13 = vsyncpa [#allocation4], 0
    %s14 = scalar_lea.sflag [#allocation4], 1
    %15 = vsyncpa %s14, 0
    loop: start=0, step=1, limit=4
    $region2: #{tpu_custom_call.1} parent=1 // loop_pre_header
      _
    $region3: #{tpu_custom_call.1} parent=1 // loop_header
      %s17 = sphi 0, %s21
      %p18 = scmp.ge.s32.totalorder %s17, 4
      %s24 = sphi 0, %s36
      %s25 = sphi 0, %s32
      %s26 = sphi 0, %s24
      %s27 = sphi 0, %s25
      %s28 = sphi 0, %s26
      %s29 = sphi 0, %s27
      %s37 = sphi 0, %s37
      %s39 = sphi 0, %s37
      %s40 = sphi 0, %s39
      %s54 = sphi 0, %s40
      %s58 = sphi 0, %s58
      %s60 = sphi 0, %s58
      %s61 = sphi 0, %s60
      %s75 = sphi 0, %s61
      %s81 = sphi 0, %s83
      %s84 = sphi 0, %s81
      %s85 = sphi 0, %s84
      %s101 = sphi 0, %s85
      %s109 = sphi 0, %s111
      %s112 = sphi 0, %s109
      %s113 = sphi 0, %s112
      %s129 = sphi 0, %s113
      %s137 = sphi 0, %s139
      %s140 = sphi 0, %s137
      %s141 = sphi 0, %s140
      %s157 = sphi 0, %s141
    $region4: #{tpu_custom_call.1} parent=1 // loop_header_branch
      %20 = sbr.rel (%p18) target = $region8
    $region5: #{tpu_custom_call.1} parent=1 // loop_body
      %s22 = ssub.s32 %s17, 1
      %s23 = ssub.s32 %s17, 2
      %s30 = sadd.s32 1, %s25
      %p31 = scmp.ge.s32.totalorder %s30, 1
      %s32 = scalar_select %p31, 0, %s30
      %s33 = sadd.s32 1, %s24
      %s34 = scalar_select %p31, %s33, %s24
      %p35 = scmp.ge.s32.totalorder %s34, 2
      %s36 = scalar_select %p35, 0, %s34
      %s38 = sadd.s32 %s37, 1
      %p41 = scmp.eq.s32.totalorder %s17, 1
      %p42 = scmp.ne.s32.totalorder %s37, %s39
      %p43 = scmp.eq.s32.totalorder %s17, 0
      %p44 = por %p42, %p43
      %p45 = scmp.ne.s32.totalorder %s37, %s39
      %p46 = scmp.eq.s32.totalorder %s22, 1
      %p47 = por %p45, %p46
      %p48 = scmp.ne.s32.totalorder %s39, %s40
      %p49 = scmp.eq.s32.totalorder %s22, 0
      %p50 = por %p48, %p49
      %p51 = scmp.ne.s32.totalorder %s39, %s40
      %p52 = scmp.eq.s32.totalorder %s23, 1
      %p53 = por %p51, %p52
      %p55 = scmp.ne.s32.totalorder %s40, %s54
      %p56 = scmp.eq.s32.totalorder %s23, 0
      %p57 = por %p55, %p56
      %s59 = sadd.s32 %s58, 1
      %p62 = scmp.eq.s32.totalorder %s17, 1
      %p63 = scmp.ne.s32.totalorder %s58, %s60
      %p64 = scmp.eq.s32.totalorder %s17, 0
      %p65 = por %p63, %p64
      %p66 = scmp.ne.s32.totalorder %s58, %s60
      %p67 = scmp.eq.s32.totalorder %s22, 1
      %p68 = por %p66, %p67
      %p69 = scmp.ne.s32.totalorder %s60, %s61
      %p70 = scmp.eq.s32.totalorder %s22, 0
      %p71 = por %p69, %p70
      %p72 = scmp.ne.s32.totalorder %s60, %s61
      %p73 = scmp.eq.s32.totalorder %s23, 1
      %p74 = por %p72, %p73
      %p76 = scmp.ne.s32.totalorder %s61, %s75
      %p77 = scmp.eq.s32.totalorder %s23, 0
      %p78 = por %p76, %p77
      %s79 = ssub.s32 %s24, %s36
      %p80 = scmp.eq.s32.totalorder %s79, 0
      %s82 = sadd.s32 %s81, 1
      %s83 = scalar_select %p80, %s81, %s82
      %p86 = pneg %p80
      %p87 = scmp.eq.s32.totalorder %s17, 1
      %p88 = por %p86, %p87
      %p89 = scmp.ne.s32.totalorder %s81, %s84
      %p90 = scmp.eq.s32.totalorder %s17, 0
      %p91 = por %p89, %p90
      %p92 = scmp.ne.s32.totalorder %s81, %s84
      %p93 = scmp.eq.s32.totalorder %s22, 1
      %p94 = por %p92, %p93
      %p95 = scmp.ne.s32.totalorder %s84, %s85
      %p96 = scmp.eq.s32.totalorder %s22, 0
      %p97 = por %p95, %p96
      %p98 = scmp.ne.s32.totalorder %s84, %s85
      %p99 = scmp.eq.s32.totalorder %s23, 1
      %p100 = por %p98, %p99
      %p102 = scmp.ne.s32.totalorder %s85, %s101
      %p103 = scmp.eq.s32.totalorder %s23, 0
      %p104 = por %p102, %p103
      %s105 = ssub.s32 %s24, %s36
      %s106 = ssub.s32 %s25, %s32
      %s107 = sor.u32 %s105, %s106
      %p108 = scmp.eq.s32.totalorder %s107, 0
      %s110 = sadd.s32 %s109, 1
      %s111 = scalar_select %p108, %s109, %s110
      %p114 = pneg %p108
      %p115 = scmp.eq.s32.totalorder %s17, 1
      %p116 = por %p114, %p115
      %p117 = scmp.ne.s32.totalorder %s109, %s112
      %p118 = scmp.eq.s32.totalorder %s17, 0
      %p119 = por %p117, %p118
      %p120 = scmp.ne.s32.totalorder %s109, %s112
      %p121 = scmp.eq.s32.totalorder %s22, 1
      %p122 = por %p120, %p121
      %p123 = scmp.ne.s32.totalorder %s112, %s113
      %p124 = scmp.eq.s32.totalorder %s22, 0
      %p125 = por %p123, %p124
      %p126 = scmp.ne.s32.totalorder %s112, %s113
      %p127 = scmp.eq.s32.totalorder %s23, 1
      %p128 = por %p126, %p127
      %p130 = scmp.ne.s32.totalorder %s113, %s129
      %p131 = scmp.eq.s32.totalorder %s23, 0
      %p132 = por %p130, %p131
      %s133 = ssub.s32 %s24, %s36
      %s134 = ssub.s32 %s25, %s32
      %s135 = sor.u32 %s133, %s134
      %p136 = scmp.eq.s32.totalorder %s135, 0
      %s138 = sadd.s32 %s137, 1
      %s139 = scalar_select %p136, %s137, %s138
      %p142 = pneg %p136
      %p143 = scmp.eq.s32.totalorder %s17, 1
      %p144 = por %p142, %p143
      %p145 = scmp.ne.s32.totalorder %s137, %s140
      %p146 = scmp.eq.s32.totalorder %s17, 0
      %p147 = por %p145, %p146
      %p148 = scmp.ne.s32.totalorder %s137, %s140
      %p149 = scmp.eq.s32.totalorder %s22, 1
      %p150 = por %p148, %p149
      %p151 = scmp.ne.s32.totalorder %s140, %s141
      %p152 = scmp.eq.s32.totalorder %s22, 0
      %p153 = por %p151, %p152
      %p154 = scmp.ne.s32.totalorder %s140, %s141
      %p155 = scmp.eq.s32.totalorder %s23, 1
      %p156 = por %p154, %p155
      %p158 = scmp.ne.s32.totalorder %s141, %s157
      %p159 = scmp.eq.s32.totalorder %s23, 0
      %p160 = por %p158, %p159
      %p161 = scmp.le.s32.totalorder 1, %s17
      %p162 = scmp.lt.s32.totalorder %s17, 3
      %p163 = pnand %p161, %p162
      %p164 = pneg %p163
      // Predicated region
      $region9: #{tpu_custom_call.1} parent=5 // pred_check
        _
      $region10: #{tpu_custom_call.1} parent=5 // pred_check_branch
        %166 = sbr.rel (%p163) target = $region12
      $region11: #{tpu_custom_call.1} parent=5 // pred_region
        %s167 = ssub.s32 %s17, 1
        // Predicated region
        $region13: #{tpu_custom_call.1} parent=11 // pred_check
          %p168 = pneg %p50
        $region14: #{tpu_custom_call.1} parent=11 // pred_check_branch
          %170 = sbr.rel (%p168) target = $region16
        $region15: #{tpu_custom_call.1} parent=11 // pred_region
          _
        $region16: #{tpu_custom_call.1} parent=11 // pred_fallthru
          _
        // Predicated region
        $region17: #{tpu_custom_call.1} parent=11 // pred_check
          %p171 = pneg %p71
        $region18: #{tpu_custom_call.1} parent=11 // pred_check_branch
          %173 = sbr.rel (%p171) target = $region20
        $region19: #{tpu_custom_call.1} parent=11 // pred_region
          %175 = vsyncadd [#allocation3], 0
          %s176 = sshll.u32 %s1, 4
          %s177 = int_to_ptr.hbm [resolvable:$true] %s176
          %s178 = sshll.u32 [#allocation2], 4
          %s179 = int_to_ptr.vmem [resolvable:$true] %s178
          %184 = dma.hbm_to_vmem [thread:$0]  %s177, 2048, %s179, [#allocation3], 128, 128, 8
        $region20: #{tpu_custom_call.1} parent=11 // pred_fallthru
          _
      $region12: #{tpu_custom_call.1} parent=5 // pred_fallthru
        _
      %p185 = scmp.lt.s32.totalorder %s17, 2
      // Predicated region
      $region21: #{tpu_custom_call.1} parent=5 // pred_check
        %p186 = pneg %p185
      $region22: #{tpu_custom_call.1} parent=5 // pred_check_branch
        %188 = sbr.rel (%p186) target = $region24
      $region23: #{tpu_custom_call.1} parent=5 // pred_region
        // Predicated region
        $region25: #{tpu_custom_call.1} parent=23 // pred_check
          %p189 = pneg %p91
        $region26: #{tpu_custom_call.1} parent=23 // pred_check_branch
          %191 = sbr.rel (%p189) target = $region28
        $region27: #{tpu_custom_call.1} parent=23 // pred_region
          %p192 = scmp.lt.s32.totalorder %s24, 1
          %s193 = scalar_select %p192, %s24, 1
          %s194 = smul.addr %s193, 4
          %s195 = scalar_lea.vmem %s2, %s194
        $region28: #{tpu_custom_call.1} parent=23 // pred_fallthru
          _
        // Predicated region
        $region29: #{tpu_custom_call.1} parent=23 // pred_check
          %p196 = pneg %p119
        $region30: #{tpu_custom_call.1} parent=23 // pred_check_branch
          %198 = sbr.rel (%p196) target = $region32
        $region31: #{tpu_custom_call.1} parent=23 // pred_region
          %s199 = sand.u32 %s109, 1
          %s200 = scalar_lea.sflag [#allocation6], %s199
          %s201 = sand.u32 %s109, 1
          %s202 = smul.addr %s201, 16
          %s203 = scalar_lea.vmem [#allocation5], %s202
          %s204 = smul.u32 2, %s25
          %206 = vsyncadd %s200, 0
          %s207 = smul.addr %s24, 2
          %s208 = sadd.s32 %s204, %s207
          %s209 = smul.addr %s208, 8
          %s210 = scalar_lea.hbm %s3, %s209
          %s211 = sshll.u32 %s210, 4
          %s212 = int_to_ptr.hbm [resolvable:$true] %s211
          %s213 = sshll.u32 %s203, 4
          %s214 = int_to_ptr.vmem [resolvable:$true] %s213
          %219 = dma.hbm_to_vmem [thread:$0]  %s212, 256, %s214, %s200, 128, 128, 8
        $region32: #{tpu_custom_call.1} parent=23 // pred_fallthru
          _
      $region24: #{tpu_custom_call.1} parent=5 // pred_fallthru
        _
      %p220 = scmp.le.s32.totalorder 1, %s17
      %p221 = scmp.lt.s32.totalorder %s17, 3
      %p222 = pnand %p220, %p221
      %p223 = pneg %p222
      // Predicated region
      $region33: #{tpu_custom_call.1} parent=5 // pred_check
        _
      $region34: #{tpu_custom_call.1} parent=5 // pred_check_branch
        %225 = sbr.rel (%p222) target = $region36
      $region35: #{tpu_custom_call.1} parent=5 // pred_region
        %s226 = ssub.s32 %s17, 1
        // Predicated region
        $region37: #{tpu_custom_call.1} parent=35 // pred_check
          %p227 = pneg %p71
        $region38: #{tpu_custom_call.1} parent=35 // pred_check_branch
          %229 = sbr.rel (%p227) target = $region40
        $region39: #{tpu_custom_call.1} parent=35 // pred_region
          %231 = dma.done [#allocation3], 2048
        $region40: #{tpu_custom_call.1} parent=35 // pred_fallthru
          _
        %s232 = sand.u32 %s112, 1
        %s233 = scalar_lea.sflag [#allocation6], %s232
        %s234 = sand.u32 %s112, 1
        %s235 = smul.addr %s234, 16
        %s236 = scalar_lea.vmem [#allocation5], %s235
        // Predicated region
        $region41: #{tpu_custom_call.1} parent=35 // pred_check
          %p237 = pneg %p125
        $region42: #{tpu_custom_call.1} parent=35 // pred_check_branch
          %239 = sbr.rel (%p237) target = $region44
        $region43: #{tpu_custom_call.1} parent=35 // pred_region
          %241 = dma.done %s233, 256
        $region44: #{tpu_custom_call.1} parent=35 // pred_fallthru
          _
        %p242 = pneg %p50
        %p243 = pneg %p47
        %p244 = pneg %p71
        %p245 = pneg %p68
        %p246 = scmp.lt.s32.totalorder %s26, 1
        %s247 = scalar_select %p246, %s26, 1
        %s248 = smul.addr %s247, 4
        %s249 = scalar_lea.vmem %s2, %s248
        %p250 = pneg %p97
        %p251 = pneg %p94
        %s252 = sand.u32 %s112, 1
        %s253 = scalar_lea.sflag [#allocation6], %s252
        %s254 = sand.u32 %s112, 1
        %s255 = smul.addr %s254, 16
        %s256 = scalar_lea.vmem [#allocation5], %s255
        %p257 = pneg %p125
        %p258 = pneg %p122
        %p259 = pneg %p153
        %p260 = pneg %p150
        %s261 = sand.u32 %s140, 1
        %s262 = scalar_lea.sflag [#allocation4], %s261
        %s263 = sand.u32 %s140, 1
        %s264 = smul.addr %s263, 16
        %s265 = scalar_lea.vmem [#allocation7], %s264
        %p266 = scmp.lt.s32.totalorder %s26, 1
        %s267 = scalar_select %p266, %s26, 1
        %s268 = smul.addr %s267, 4
        %s269 = scalar_lea.vmem %s2, %s268
        %s270 = smul.u32 2, %s27
        %s271 = smul.u32 2, %s27
        %v272 = vld [vmem:[%s269] sm:$0x7]
        %vm273 = vcmask 1042432
        %v274 = vsel %vm273, %v272, 0.0
        %v275 = vrot.slane %v274, 4
        %v276 = vadd.f32 %v274, %v275
        %v277 = vrot.slane %v276, 2
        %v278 = vadd.f32 %v276, %v277
        %v279 = vrot.slane %v278, 1
        %v280 = vadd.f32 %v278, %v279
        %v281 = vrcp.pop 3.0
        %v282 = vmul.f32 3.0, %v281
        %v283 = vsub.f32 1.0, %v282
        %v284 = vmul.f32 %v281, %v283
        %v285 = vadd.f32 %v281, %v284
        %vm286 = vweird.f32 %v281
        %v287 = vsel %vm286, %v281, %v285
        %v288 = vmul.f32 %v280, %v287
        %v289 = vld [vmem:[%s0] sm:$0x7]
        %v290 = vmul.f32 %v289, %v288
        %v291 = vlaneseq
        %v292 = vand.u32 %v291, 127
        %vm293 = vcmp.lt.s32.totalorder %v292, 25
        %v294 = vsel %vm293, %v290, inf
        %v295 = vsel %vm273, %v294, inf
        %296 = vmin.xlane.f32.xlu0 %v295
        %v297 = vpop.xlane.xlu0 %296
        %v298 = vsub.f32 %v290, %v297
        %v299 = vsel %vm293, %v298, -inf
        %v300 = vsel %vm273, %v299, -inf
        %301 = vmax.xlane.f32.xlu0 %v300
        %v302 = vpop.xlane.xlu0 %301
        %v303 = vrcp.pop %v302
        %v304 = vmul.f32 %v302, %v303
        %v305 = vsub.f32 1.0, %v304
        %v306 = vmul.f32 %v303, %v305
        %v307 = vadd.f32 %v303, %v306
        %vm308 = vweird.f32 %v302
        %vm309 = vweird.f32 %v303
        %vm310 = vmor %vm308, %vm309
        %v311 = vsel %vm310, %v303, %v307
        %v312 = vand.u32 2147483647, %v302
        %vm313 = vcmp.eq.f32.partialorder %v312, 8.507059e+37
        %v314 = vand.u32 %v302, 2147483648
        %v315 = vor.u32 1.1754944e-38, %v314
        %v316 = vsel %vm313, %v315, %v311
        %v317 = vmul.f32 %v298, %v316
        %v318 = vsel %vm273, %v317, 0.0
        %v319 = vrot.slane %v318, 4
        %v320 = vadd.f32 %v318, %v319
        %v321 = vrot.slane %v320, 2
        %v322 = vadd.f32 %v320, %v321
        %v323 = vrot.slane %v322, 1
        %v324 = vadd.f32 %v322, %v323
        %v325 = vmul.f32 %v324, %v287
        %v326 = vld [vmem:[#allocation2] sm:$0xff]
        %v327 = vld [vmem:[#allocation2 + $0x8] sm:$0xff]
        %v328 = vld [vmem:[#allocation2 + $0x10] sm:$0xff]
        %v329 = vld [vmem:[#allocation2 + $0x18] sm:$0xff]
        %v330 = vld [vmem:[#allocation2 + $0x20] sm:$0xff]
        %v331 = vld [vmem:[#allocation2 + $0x28] sm:$0xff]
        %v332 = vld [vmem:[#allocation2 + $0x30] sm:$0xff]
        %v333 = vld [vmem:[#allocation2 + $0x38] sm:$0xff]
        %v334 = vld [vmem:[#allocation2 + $0x40] sm:$0xff]
        %v335 = vld [vmem:[#allocation2 + $0x48] sm:$0xff]
        %v336 = vld [vmem:[#allocation2 + $0x50] sm:$0xff]
        %v337 = vld [vmem:[#allocation2 + $0x58] sm:$0xff]
        %v338 = vld [vmem:[#allocation2 + $0x60] sm:$0xff]
        %v339 = vld [vmem:[#allocation2 + $0x68] sm:$0xff]
        %v340 = vld [vmem:[#allocation2 + $0x70] sm:$0xff]
        %v341 = vld [vmem:[#allocation2 + $0x78] sm:$0xff]
        %342 = vmatpush.msra.mxu0 %v341
        %343 = vmatpush.msra.mxu0 %v340
        %344 = vmatpush.msra.mxu0 %v339
        %345 = vmatpush.msra.mxu0 %v338
        %346 = vmatpush.msra.mxu0 %v337
        %347 = vmatpush.msra.mxu0 %v336
        %348 = vmatpush.msra.mxu0 %v335
        %349 = vmatpush.msra.mxu0 %v334
        %350 = vmatpush.msra.mxu0 %v333
        %351 = vmatpush.msra.mxu0 %v332
        %352 = vmatpush.msra.mxu0 %v331
        %353 = vmatpush.msra.mxu0 %v330
        %354 = vmatpush.msra.mxu0 %v329
        %355 = vmatpush.msra.mxu0 %v328
        %356 = vmatpush.msra.mxu0 %v327
        %357 = vmatpush.msra.mxu0 %v326
        %358 = vmatmul.f32.gmra.mxu0 %v325
        %v359 = vpop.f32.mrf.mxu0
        %v360 = vadd.f32 0.0, %v359
        %361 = vdwg.mxu0
        %v362 = vld [vmem:[%s236] sm:$0xff]
        %v363 = vld [vmem:[%s236 + $0x8] sm:$0xff]
        %v364 = vperm.slane %v360, 0
        %v365 = vmul.f32 %v364, %v362
        %v366 = vmul.f32 %v364, %v363
        %367 = vst [vmem:[%s265] sm:$0xff] %v365
        %368 = vst [vmem:[%s265 + $0x8] sm:$0xff] %v366
        %s369 = sand.u32 %s140, 1
        %s370 = scalar_lea.sflag [#allocation4], %s369
        %s371 = sand.u32 %s140, 1
        %s372 = smul.addr %s371, 16
        %s373 = scalar_lea.vmem [#allocation7], %s372
        // Predicated region
        $region45: #{tpu_custom_call.1} parent=35 // pred_check
          %p374 = pneg %p150
        $region46: #{tpu_custom_call.1} parent=35 // pred_check_branch
          %376 = sbr.rel (%p374) target = $region48
        $region47: #{tpu_custom_call.1} parent=35 // pred_region
          %s377 = smul.u32 2, %s27
          %379 = vsyncadd %s370, 0
          %s380 = smul.addr %s26, 2
          %s381 = sadd.s32 %s377, %s380
          %s382 = smul.addr %s381, 8
          %s383 = scalar_lea.hbm %s4, %s382
          %s384 = sshll.u32 %s373, 4
          %s385 = int_to_ptr.vmem [resolvable:$true] %s384
          %s386 = sshll.u32 %s383, 4
          %s387 = int_to_ptr.hbm [resolvable:$true] %s386
          %392 = dma.vmem_to_hbm [thread:$0]  %s385, 256, %s387, %s370, 128, 128, 8
        $region48: #{tpu_custom_call.1} parent=35 // pred_fallthru
          _
      $region36: #{tpu_custom_call.1} parent=5 // pred_fallthru
        _
      %p393 = scmp.le.s32.totalorder 2, %s17
      // Predicated region
      $region49: #{tpu_custom_call.1} parent=5 // pred_check
        %p394 = pneg %p393
      $region50: #{tpu_custom_call.1} parent=5 // pred_check_branch
        %396 = sbr.rel (%p394) target = $region52
      $region51: #{tpu_custom_call.1} parent=5 // pred_region
        %s397 = ssub.s32 %s17, 2
        // Predicated region
        $region53: #{tpu_custom_call.1} parent=51 // pred_check
          %p398 = pneg %p156
        $region54: #{tpu_custom_call.1} parent=51 // pred_check_branch
          %400 = sbr.rel (%p398) target = $region56
        $region55: #{tpu_custom_call.1} parent=51 // pred_region
          %s401 = sand.u32 %s141, 1
          %s402 = scalar_lea.sflag [#allocation4], %s401
          %s403 = sand.u32 %s141, 1
          %s404 = smul.addr %s403, 16
          %s405 = scalar_lea.vmem [#allocation7], %s404
          %407 = dma.done %s402, 256
        $region56: #{tpu_custom_call.1} parent=51 // pred_fallthru
          _
      $region52: #{tpu_custom_call.1} parent=5 // pred_fallthru
        _
    $region6: #{tpu_custom_call.1} parent=1 // loop_footer
      %s21 = sadd.s32 1, %s17
    $region7: #{tpu_custom_call.1} parent=1 // loop_footer_branch
      %16 = sbr.rel target = $region3
    $region8: #{tpu_custom_call.1} parent=1 // loop_exit
      _
    %408 = vsyncpa [#allocation3], 1
    %s409 = scalar_lea.sflag [#allocation3], 1
    %410 = vsyncpa %s409, 1
    %411 = vsyncpa [#allocation6], 1
    %s412 = scalar_lea.sflag [#allocation6], 1
    %413 = vsyncpa %s412, 1
    %414 = vsyncpa [#allocation4], 1
    %s415 = scalar_lea.sflag [#allocation4], 1
    %416 = vsyncpa %s415, 1

</llo_original>
